<compile_context>
chip_gen: v5e
topology: v5e:2x2
jax: 0.10.0
libtpu: 0.0.40
codegen_flags: <defaults>
</compile_context>

<pallas_src>
import functools

import jax
import jax.numpy as jnp
from jax.experimental import pallas as pl
from jax.experimental.pallas import tpu as pltpu

LANE = 128
SUB = 8
R_TILE_MAX = 8192          # rows per block -> 4 MiB per f32 input block
PRED_PAD = -1e9            # sentinel logit: with target 0 it contributes exactly 0 loss


def _num_tensorcores() -> int:
    """Best-effort TensorCores-per-chip (v7x: 2, v5e/v6e: 1). Falls back to 1."""
    try:
        info = pltpu.get_tpu_info()
    except Exception:
        return 1
    for name in ("tensorcore_count", "num_tensorcores", "num_cores",
                 "core_count", "num_cores_per_chip", "cores_per_chip"):
        v = getattr(info, name, None)
        if isinstance(v, int) and v >= 1:
            return min(v, 2)
    return 1


def _focal_kernel(pred_ref, tgt_ref, out_ref, *, alpha, gamma,
                  valid_rows, rows_per_block, tiles_per_split, need_mask):
    p = pl.program_id(0)
    i = pl.program_id(1)

    @pl.when(i == 0)
    def _():
        out_ref[...] = jnp.zeros_like(out_ref)

    x = pred_ref[...].astype(jnp.float32)        # (rows_per_block, 128)
    t = tgt_ref[...].astype(jnp.float32)

    if need_mask:
        # The boundary block of the grid reads past the end of the slab (garbage,
        # possibly NaN/Inf). Mask x/t BEFORE exp so those rows contribute exactly 0.
        base = (p * tiles_per_split + i) * rows_per_block
        row = base + jax.lax.broadcasted_iota(jnp.int32, x.shape, 0)
        valid = row < valid_rows
        x = jnp.where(valid, x, jnp.float32(PRED_PAD))
        t = jnp.where(valid, t, 0.0)

    # Stable BCE-with-logits and sigmoid sharing a single exp():
    #   e    = exp(-|x|)
    #   bce  = max(x, 0) - x*t + log1p(e)
    #   sig  = 1/(1+e)  if x >= 0  else  e/(1+e)
    e = jnp.exp(-jnp.abs(x))
    bce = jnp.maximum(x, 0.0) - x * t + jnp.log1p(e)
    inv = 1.0 / (1.0 + e)                         # exact divide: kernel is HBM-bound
    probs = jnp.where(x >= 0.0, inv, e * inv)

    # NOTE: `t == 1.0` assumes hard {0,1} targets (same contract as the PyTorch ref).
    pt = jnp.where(t == 1.0, probs, 1.0 - probs)
    one_m_pt = 1.0 - pt
    if float(gamma) == 2.0:
        focal = one_m_pt * one_m_pt               # avoid pow() for the default gamma
    else:
        focal = jnp.power(one_m_pt, jnp.float32(gamma))
    loss = focal * bce
    if alpha is not None:
        loss = loss * jnp.where(t == 1.0, jnp.float32(alpha), jnp.float32(1.0 - alpha))

    # Per-step partial: reduce the tile to one (1, 128) lane vector (VPU vreg adds plus
    # one tiny sublane reduce) and accumulate into row 0 of the resident output block.
    # The single cross-lane reduce + mean normalization happens once, in the wrapper.
    out_ref[0:1, :] = out_ref[0:1, :] + jnp.sum(loss, axis=0, keepdims=True)


def binary_focal_loss(pred: jax.Array, target: jax.Array,
                      alpha: float = 0.25, gamma: float = 2.0,
                      r_tile_max: int = R_TILE_MAX) -> jax.Array:
    # PyTorch semantics: pred.squeeze(); target.float(); elementwise focal loss; .mean().
    pred = jnp.squeeze(pred)
    assert pred.size == target.size, (pred.shape, target.shape)
    n = pred.size

    pred_flat = pred.reshape(-1)
    tgt_flat = target.reshape(-1)
    if not jnp.issubdtype(tgt_flat.dtype, jnp.floating):
        tgt_flat = tgt_flat.astype(jnp.float32)   # matches PyTorch target.float()

    # Lane-dense (R, 128) slab view. The reshape is free; only when n is not a multiple
    # of 128 do we pay a tiny sentinel pad (padded elements give exactly zero loss).
    rem = n % LANE
    if rem:
        pad = LANE - rem
        pred_flat = jnp.pad(pred_flat, (0, pad), constant_values=PRED_PAD)
        tgt_flat = jnp.pad(tgt_flat, (0, pad), constant_values=0)
    R = pred_flat.size // LANE
    p2 = pred_flat.reshape(R, LANE)
    t2 = tgt_flat.reshape(R, LANE)

    # Tile sizing: one full-extent block for small/medium inputs (no overread), 4 MiB
    # blocks for large ones. Split the block count across TensorCores only when it
    # divides evenly (never creates fully out-of-bounds blocks).
    tc = _num_tensorcores()
    r_tile = R if R <= r_tile_max else r_tile_max
    num_blocks = pl.cdiv(R, r_tile)
    n_split = 1
    if tc > 1 and num_blocks >= 2 * tc:
        if num_blocks % tc:
            # Nudge the tile size down so the block count splits evenly across TCs.
            nb = ((num_blocks + tc - 1) // tc) * tc
            r_tile = ((pl.cdiv(R, nb) + 31) // 32) * 32
            num_blocks = pl.cdiv(R, r_tile)
        if num_blocks % tc == 0:
            n_split = tc
    tiles_per_split = num_blocks // n_split
    need_mask = (num_blocks * r_tile != R)        # static: zero cost when aligned

    kernel = functools.partial(
        _focal_kernel, alpha=alpha, gamma=gamma, valid_rows=R,
        rows_per_block=r_tile, tiles_per_split=tiles_per_split, need_mask=need_mask)

    bytes_accessed = int(R * LANE * (p2.dtype.itemsize + t2.dtype.itemsize)
                         + n_split * SUB * LANE * 4)
    cost = pl.CostEstimate(flops=int(14 * n), transcendentals=int(2 * n),
                           bytes_accessed=bytes_accessed)

    partials = pl.pallas_call(
        kernel,
        out_shape=jax.ShapeDtypeStruct((n_split * SUB, LANE), jnp.float32),
        grid_spec=pltpu.PrefetchScalarGridSpec(
            num_scalar_prefetch=0,
            grid=(n_split, tiles_per_split),
            in_specs=[
                pl.BlockSpec((r_tile, LANE),
                             lambda p, i: (p * tiles_per_split + i, 0)),
                pl.BlockSpec((r_tile, LANE),
                             lambda p, i: (p * tiles_per_split + i, 0)),
            ],
            out_specs=pl.BlockSpec((SUB, LANE), lambda p, i: (p, 0)),
        ),
        compiler_params=pltpu.CompilerParams(
            dimension_semantics=("parallel", "arbitrary"),
            vmem_limit_bytes=32 * 1024 * 1024),
        cost_estimate=cost,
    )(p2, t2)

    # Single cross-lane reduce + mean normalization, outside the kernel.
    return jnp.sum(partials) / jnp.float32(n)


def _reference(pred, target, alpha=0.25, gamma=2.0):
    pred = jnp.squeeze(pred).astype(jnp.float32)
    target = target.astype(jnp.float32)
    bce = jnp.maximum(pred, 0.0) - pred * target + jnp.log1p(jnp.exp(-jnp.abs(pred)))
    probs = jax.nn.sigmoid(pred)
    pt = jnp.where(target == 1.0, probs, 1.0 - probs)
    fw = (1.0 - pt) ** gamma
    aw = jnp.where(target == 1.0, alpha, 1.0 - alpha)
    return jnp.mean(fw * aw * bce)


if __name__ == "__main__":
    key = jax.random.PRNGKey(0)
    k1, k2, k3, k4, k5, k6 = jax.random.split(key, 6)

    # Small case: NCHW logits with singleton channel; hard binary targets.
    pred = jax.random.normal(k1, (2, 1, 16, 16), dtype=jnp.float32)
    target = jax.random.bernoulli(k2, p=0.3, shape=(2, 16, 16)).astype(jnp.float32)
    loss = jax.block_until_ready(binary_focal_loss(pred, target, alpha=0.25, gamma=2.0))
    ref = _reference(pred, target, alpha=0.25, gamma=2.0)
    assert jnp.allclose(loss, ref, rtol=1e-5, atol=1e-6), (loss, ref)

    # Medium case: single full-extent block, no padding, no mask.
    pred2 = jax.random.normal(k3, (2, 1, 384, 384), dtype=jnp.float32)
    target2 = jax.random.bernoulli(k4, p=0.3, shape=(2, 384, 384)).astype(jnp.float32)
    loss2 = jax.block_until_ready(binary_focal_loss(pred2, target2, alpha=0.25, gamma=2.0))
    ref2 = _reference(pred2, target2, alpha=0.25, gamma=2.0)
    assert jnp.allclose(loss2, ref2, rtol=1e-5, atol=1e-6), (loss2, ref2)

    # Ragged case with a small tile cap: exercises the multi-block grid, the in-kernel
    # boundary mask, and the (rare) 128-alignment pad path.
    pred3 = jax.random.normal(k5, (2, 1, 100, 100), dtype=jnp.float32)
    target3 = jax.random.bernoulli(k6, p=0.3, shape=(2, 100, 100)).astype(jnp.float32)
    loss3 = jax.block_until_ready(
        binary_focal_loss(pred3, target3, alpha=0.25, gamma=2.0, r_tile_max=64))
    ref3 = _reference(pred3, target3, alpha=0.25, gamma=2.0)
    assert jnp.allclose(loss3, ref3, rtol=1e-5, atol=1e-6), (loss3, ref3)

    print("KERNEL_OK")
</pallas_src>

<mosaic_0001>
module attributes {stable_mosaic.version = 11 : i64} {
  func.func @_focal_kernel(%arg0: i32, %arg1: i32, %arg2: memref<4x128xf32, #tpu.memory_space<vmem>>, %arg3: memref<4x128xf32, #tpu.memory_space<vmem>>, %arg4: memref<8x128xf32, #tpu.memory_space<vmem>>) attributes {dimension_semantics = [#tpu.dimension_semantics<parallel>, #tpu.dimension_semantics<arbitrary>], iteration_bounds = array<i64: 1, 1>, scalar_prefetch = 0 : i64, scratch_operands = 0 : i64, tpu.core_type = #tpu.core_type<tc>, window_params = [{transform_indices = @transform_0, window_bounds = array<i64: 4, 128>}, {transform_indices = @transform_1, window_bounds = array<i64: 4, 128>}, {transform_indices = @transform_2, window_bounds = array<i64: 8, 128>}]} {
    %c0_i32 = arith.constant 0 : i32
    %0 = arith.cmpi eq, %arg1, %c0_i32 : i32
    %1 = arith.extui %0 : i1 to i32
    %c0_i32_0 = arith.constant 0 : i32
    %2 = arith.cmpi ne, %1, %c0_i32_0 : i32
    scf.if %2 {
      %cst_19 = arith.constant 0.000000e+00 : f32
      %43 = vector.broadcast %cst_19 : f32 to vector<8x128xf32>
      %c0_20 = arith.constant 0 : index
      %c0_21 = arith.constant 0 : index
      %44 = vector.load %arg4[%c0_20, %c0_21] : memref<8x128xf32, #tpu.memory_space<vmem>>, vector<8x128xf32>
      tpu.vector_store %arg4[%c0_20, %c0_21], %43 {strides = array<i32>} : memref<8x128xf32, #tpu.memory_space<vmem>>, vector<8x128xf32>,
    } else {
    }
    %c0 = arith.constant 0 : index
    %c0_1 = arith.constant 0 : index
    %3 = vector.load %arg2[%c0, %c0_1] : memref<4x128xf32, #tpu.memory_space<vmem>>, vector<4x128xf32>
    %c0_2 = arith.constant 0 : index
    %c0_3 = arith.constant 0 : index
    %4 = vector.load %arg3[%c0_2, %c0_3] : memref<4x128xf32, #tpu.memory_space<vmem>>, vector<4x128xf32>
    %5 = math.absf %3 : vector<4x128xf32>
    %cst = arith.constant 0.000000e+00 : f32
    %6 = vector.broadcast %cst : f32 to vector<4x128xf32>
    %7 = arith.subf %6, %5 : vector<4x128xf32>
    %8 = math.exp %7 : vector<4x128xf32>
    %cst_4 = arith.constant 0.000000e+00 : f32
    %9 = vector.broadcast %cst_4 : f32 to vector<4x128xf32>
    %10 = arith.maximumf %3, %9 : vector<4x128xf32>
    %11 = arith.mulf %3, %4 : vector<4x128xf32>
    %12 = arith.subf %10, %11 : vector<4x128xf32>
    %13 = math.log1p %8 : vector<4x128xf32>
    %14 = arith.addf %12, %13 : vector<4x128xf32>
    %cst_5 = arith.constant 1.000000e+00 : f32
    %15 = vector.broadcast %cst_5 : f32 to vector<4x128xf32>
    %16 = arith.addf %15, %8 : vector<4x128xf32>
    %cst_6 = arith.constant 1.000000e+00 : f32
    %17 = vector.broadcast %cst_6 : f32 to vector<4x128xf32>
    %18 = arith.divf %17, %16 : vector<4x128xf32>
    %cst_7 = arith.constant 0.000000e+00 : f32
    %19 = vector.broadcast %cst_7 : f32 to vector<4x128xf32>
    %20 = arith.cmpf oge, %3, %19 : vector<4x128xf32>
    %21 = arith.mulf %8, %18 : vector<4x128xf32>
    %22 = arith.select %20, %18, %21 : vector<4x128xi1>, vector<4x128xf32>
    %cst_8 = arith.constant 1.000000e+00 : f32
    %23 = vector.broadcast %cst_8 : f32 to vector<4x128xf32>
    %24 = arith.cmpf oeq, %4, %23 : vector<4x128xf32>
    %cst_9 = arith.constant 1.000000e+00 : f32
    %25 = vector.broadcast %cst_9 : f32 to vector<4x128xf32>
    %26 = arith.subf %25, %22 : vector<4x128xf32>
    %27 = arith.select %24, %22, %26 : vector<4x128xi1>, vector<4x128xf32>
    %cst_10 = arith.constant 1.000000e+00 : f32
    %28 = vector.broadcast %cst_10 : f32 to vector<4x128xf32>
    %29 = arith.subf %28, %27 : vector<4x128xf32>
    %30 = arith.mulf %29, %29 : vector<4x128xf32>
    %31 = arith.mulf %30, %14 : vector<4x128xf32>
    %cst_11 = arith.constant 1.000000e+00 : f32
    %32 = vector.broadcast %cst_11 : f32 to vector<4x128xf32>
    %33 = arith.cmpf oeq, %4, %32 : vector<4x128xf32>
    %cst_12 = arith.constant 2.500000e-01 : f32
    %cst_13 = arith.constant 7.500000e-01 : f32
    %34 = vector.broadcast %cst_12 : f32 to vector<4x128xf32>
    %35 = vector.broadcast %cst_13 : f32 to vector<4x128xf32>
    %36 = arith.select %33, %34, %35 : vector<4x128xi1>, vector<4x128xf32>
    %37 = arith.mulf %31, %36 : vector<4x128xf32>
    %c0_14 = arith.constant 0 : index
    %c0_15 = arith.constant 0 : index
    %38 = vector.load %arg4[%c0_14, %c0_15] : memref<8x128xf32, #tpu.memory_space<vmem>>, vector<1x128xf32>
    %cst_16 = arith.constant dense<0.000000e+00> : vector<128xf32>
    %39 = vector.multi_reduction <add>, %37, %cst_16 [0] : vector<4x128xf32> to vector<128xf32>
    %40 = vector.shape_cast %39 : vector<128xf32> to vector<1x128xf32>
    %41 = arith.addf %38, %40 : vector<1x128xf32>
    %c0_17 = arith.constant 0 : index
    %c0_18 = arith.constant 0 : index
    %42 = vector.load %arg4[%c0_17, %c0_18] : memref<8x128xf32, #tpu.memory_space<vmem>>, vector<1x128xf32>
    tpu.vector_store %arg4[%c0_17, %c0_18], %41 {strides = array<i32>} : memref<8x128xf32, #tpu.memory_space<vmem>>, vector<1x128xf32>,
    return
  }
  func.func @transform_0(%arg0: i32, %arg1: i32) -> (i32, i32) {
    %c1_i32 = arith.constant 1 : i32
    %0 = arith.muli %arg0, %c1_i32 : i32
    %1 = arith.addi %0, %arg1 : i32
    %c0_i32 = arith.constant 0 : i32
    %c0_i32_0 = arith.constant 0 : i32
    return %1, %c0_i32 : i32, i32
  }
  func.func @transform_1(%arg0: i32, %arg1: i32) -> (i32, i32) {
    %c1_i32 = arith.constant 1 : i32
    %0 = arith.muli %arg0, %c1_i32 : i32
    %1 = arith.addi %0, %arg1 : i32
    %c0_i32 = arith.constant 0 : i32
    %c0_i32_0 = arith.constant 0 : i32
    return %1, %c0_i32 : i32, i32
  }
  func.func @transform_2(%arg0: i32, %arg1: i32) -> (i32, i32) {
    %c0_i32 = arith.constant 0 : i32
    %c0_i32_0 = arith.constant 0 : i32
    return %arg0, %c0_i32 : i32, i32
  }
}

</mosaic_0001>

<llo_original>
// kernel: tpu_custom_call.1
$region0: #{tpu_custom_call.1}
  #allocation0 [shape = 'u32[]', space=smem, size = 0x4, offset = 0x4, fixed_abs, tag = 'smem constant byte address 0x4 - core index']
  #allocation1 [shape = 'u32[72,128]{1,0:T(1,128)}', space=vmem, size = 0x9000, scoped, tag = 'internal scratch']
  %s0 = inlined_call_operand.hbm [shape: f32[4,128], index: 0, kind: input, shape index: {}]
  %s1 = inlined_call_operand.hbm [shape: f32[4,128], index: 1, kind: input, shape index: {}]
  %s2 = inlined_call_operand.hbm [shape: f32[8,128], index: 2, kind: output, shape index: {}]
  %s3 = sld [smem:[#allocation0]]
  $region30: #{tpu_custom_call.1} parent=0
    _
  %s5 = ssub.s32 1, %s3
  %s6 = scalar_select 0, %s5, %s3
  $region1: #{tpu_custom_call.1} parent=0
    #allocation2 [shape = 'u8[2048]{0}', space=vmem, size = 0x800, scoped, tag = 'input window, operand 0, single buffered']
    #allocation3 [shape = 's32[1]{0}', space=sflag, size = 0x4, scoped, tag = 'scoped memory for tpu_custom_call.1']
    #allocation4 [shape = 's32[1]{0}', space=sflag, size = 0x4, scoped, tag = 'scoped memory for tpu_custom_call.1']
    #allocation5 [shape = 'u8[2048]{0}', space=vmem, size = 0x800, scoped, tag = 'input window, operand 1, single buffered']
    #allocation6 [shape = 's32[1]{0}', space=sflag, size = 0x4, scoped, tag = 'scoped memory for tpu_custom_call.1']
    #allocation7 [shape = 'u8[4096]{0}', space=vmem, size = 0x1000, scoped, tag = 'output window, operand 0, single buffered']
    %7 = vsyncpa [#allocation3], 0
    %8 = vsyncpa [#allocation6], 0
    %9 = vsyncpa [#allocation4], 0
    // Predicated region
    $region2: #{tpu_custom_call.1} parent=1 // pred_check
      _
    $region3: #{tpu_custom_call.1} parent=1 // pred_check_branch
      %11 = sbr.rel (0) target = $region5
    $region4: #{tpu_custom_call.1} parent=1 // pred_region
      %s12 = sadd.s32 0, 0
      %14 = vsyncadd [#allocation3], 0
      %s15 = smul.addr %s12, 4
      %s16 = scalar_lea.hbm %s0, %s15
      %s18 = sshll.u32 %s16, 4
      %s19 = int_to_ptr.hbm [resolvable:$true] %s18
      %s20 = sshll.u32 [#allocation2], 4
      %s21 = int_to_ptr.vmem [resolvable:$true] %s20
      %23 = dma.hbm_to_vmem [thread:$0]  %s19, 64, %s21, [#allocation3]
    $region5: #{tpu_custom_call.1} parent=1 // pred_fallthru
      _
    // Predicated region
    $region6: #{tpu_custom_call.1} parent=1 // pred_check
      _
    $region7: #{tpu_custom_call.1} parent=1 // pred_check_branch
      %25 = sbr.rel (0) target = $region9
    $region8: #{tpu_custom_call.1} parent=1 // pred_region
      %s26 = sadd.s32 0, 0
      %28 = vsyncadd [#allocation6], 0
      %s29 = smul.addr %s26, 4
      %s30 = scalar_lea.hbm %s1, %s29
      %s32 = sshll.u32 %s30, 4
      %s33 = int_to_ptr.hbm [resolvable:$true] %s32
      %s34 = sshll.u32 [#allocation5], 4
      %s35 = int_to_ptr.vmem [resolvable:$true] %s34
      %37 = dma.hbm_to_vmem [thread:$0]  %s33, 64, %s35, [#allocation6]
    $region9: #{tpu_custom_call.1} parent=1 // pred_fallthru
      _
    // Predicated region
    $region10: #{tpu_custom_call.1} parent=1 // pred_check
      _
    $region11: #{tpu_custom_call.1} parent=1 // pred_check_branch
      %39 = sbr.rel (0) target = $region13
    $region12: #{tpu_custom_call.1} parent=1 // pred_region
      %41 = dma.done [#allocation3], 64
    $region13: #{tpu_custom_call.1} parent=1 // pred_fallthru
      _
    // Predicated region
    $region14: #{tpu_custom_call.1} parent=1 // pred_check
      _
    $region15: #{tpu_custom_call.1} parent=1 // pred_check_branch
      %43 = sbr.rel (0) target = $region17
    $region16: #{tpu_custom_call.1} parent=1 // pred_region
      %45 = dma.done [#allocation6], 64
    $region17: #{tpu_custom_call.1} parent=1 // pred_fallthru
      _
    %s46 = sadd.s32 0, 0
    %s47 = sadd.s32 0, 0
    %p48 = scmp.eq.s32.totalorder 0, 0
    // Predicated region
    $region18: #{tpu_custom_call.1} parent=1 // pred_check
      %p49 = pneg %p48
    $region19: #{tpu_custom_call.1} parent=1 // pred_check_branch
      %51 = sbr.rel (%p49) target = $region21
    $region20: #{tpu_custom_call.1} parent=1 // pred_region
      %52 = vst [vmem:[#allocation7] sm:$0xff] 0.0
    $region21: #{tpu_custom_call.1} parent=1 // pred_fallthru
      _
    %v53 = vld [vmem:[#allocation2] sm:$0xf]
    %v54 = vld [vmem:[#allocation5] sm:$0xf]
    %v55 = vand.u32 2147483647, %v53
    %v56 = vsub.f32 0.0, %v55
    %v57 = vmul.f32 %v56, 1.442695
    %v58 = vpow.pop %v57
    %v59 = vmax.f32 %v53, 0.0
    %v60 = vmul.f32 %v53, %v54
    %v61 = vsub.f32 %v59, %v60
    %v62 = vadd.f32 %v58, 1.0
    %v63 = vlog2.pop %v62
    %v64 = vmul.f32 %v63, 0.6931472
    %v65 = vmul.f32 -0.5, %v58
    %v66 = vadd.f32 %v65, 1.0
    %v67 = vmul.f32 %v66, %v58
    %v68 = vand.u32 2147483647, %v58
    %vm69 = vcmp.lt.f32.partialorder %v68, 0.0004427343
    %v70 = vsel %vm69, %v67, %v64
    %v71 = vadd.f32 %v61, %v70
    %v72 = vadd.f32 %v58, 1.0
    %v73 = vrcp.pop %v72
    %v74 = vmul.f32 %v72, %v73
    %v75 = vsub.f32 1.0, %v74
    %v76 = vmul.f32 %v73, %v75
    %v77 = vadd.f32 %v73, %v76
    %vm78 = vweird.f32 %v72
    %vm79 = vweird.f32 %v73
    %vm80 = vmor %vm78, %vm79
    %v81 = vsel %vm80, %v73, %v77
    %v82 = vand.u32 2147483647, %v72
    %vm83 = vcmp.eq.f32.partialorder %v82, 8.507059e+37
    %v84 = vand.u32 %v72, 2147483648
    %v85 = vor.u32 1.1754944e-38, %v84
    %v86 = vsel %vm83, %v85, %v81
    %v87 = vmul.f32 1.0, %v86
    %vm88 = vcmp.ge.f32.partialorder %v53, 0.0
    %v89 = vmul.f32 %v58, %v87
    %v90 = vsel %vm88, %v87, %v89
    %vm91 = vcmp.eq.f32.partialorder %v54, 1.0
    %v92 = vsub.f32 1.0, %v90
    %v93 = vsel %vm91, %v90, %v92
    %v94 = vsub.f32 1.0, %v93
    %v95 = vmul.f32 %v94, %v94
    %v96 = vmul.f32 %v95, %v71
    %v97 = vsel %vm91, 0.25, 0.75
    %v98 = vmul.f32 %v96, %v97
    %v99 = vld [vmem:[#allocation7] sm:$0x1]
    %vm100 = vcmask 1043456
    %v101 = vsel %vm100, %v98, 0.0
    %v102 = vrot.slane %v101, 4
    %v103 = vadd.f32 %v101, %v102
    %v104 = vrot.slane %v103, 2
    %v105 = vadd.f32 %v103, %v104
    %v106 = vrot.slane %v105, 1
    %v107 = vadd.f32 %v105, %v106
    %v108 = vadd.f32 %v99, %v107
    %109 = vst [vmem:[#allocation7] sm:$0x1] %v108
    // Predicated region
    $region22: #{tpu_custom_call.1} parent=1 // pred_check
      _
    $region23: #{tpu_custom_call.1} parent=1 // pred_check_branch
      %111 = sbr.rel (0) target = $region25
    $region24: #{tpu_custom_call.1} parent=1 // pred_region
      %113 = vsyncadd [#allocation4], 0
      %s115 = sshll.u32 [#allocation7], 4
      %s116 = int_to_ptr.vmem [resolvable:$true] %s115
      %s117 = sshll.u32 %s2, 4
      %s118 = int_to_ptr.hbm [resolvable:$true] %s117
      %120 = dma.vmem_to_hbm [thread:$0]  %s116, 128, %s118, [#allocation4]
    $region25: #{tpu_custom_call.1} parent=1 // pred_fallthru
      _
    // Predicated region
    $region26: #{tpu_custom_call.1} parent=1 // pred_check
      _
    $region27: #{tpu_custom_call.1} parent=1 // pred_check_branch
      %122 = sbr.rel (0) target = $region29
    $region28: #{tpu_custom_call.1} parent=1 // pred_region
      %124 = dma.done [#allocation4], 128
    $region29: #{tpu_custom_call.1} parent=1 // pred_fallthru
      _
    %125 = vsyncpa [#allocation3], 1
    %126 = vsyncpa [#allocation6], 1
    %127 = vsyncpa [#allocation4], 1

</llo_original>
